<compile_context>
chip_gen: v6e
topology: v6e:2x2x1
jax: 0.10.0
libtpu: 0.0.40
codegen_flags: <defaults>
</compile_context>

<pallas_src>
import math

import jax
import jax.numpy as jnp
from jax import lax
from jax.experimental import pallas as pl
from jax.experimental.pallas import tpu as pltpu


def _round_up(n, m):
    return ((n + m - 1) // m) * m


def _linear_kernel(x_ref, w_ref, b_ref, o_ref):
    # x_ref: (tm, nx)   w_ref: (F, nx)   b_ref: (1, F)   o_ref: (tm, F)
    # Contract x's feature axis directly against the weight's feature axis —
    # the MXU consumes the transposed RHS natively, no materialized W^T.
    acc = lax.dot_general(
        x_ref[...],
        w_ref[...],
        dimension_numbers=(((1,), (1,)), ((), ())),
        preferred_element_type=jnp.float32,
    )
    o_ref[...] = (acc + b_ref[...].astype(jnp.float32)).astype(o_ref.dtype)


def linear_output_net_forward(x, weight, bias, ny, *, block_rows=4096,
                              min_pallas_rows=1024, force_pallas=False):
    """Forward pass of linear_output_net.

    x:      (B, nx)     input batch (any float dtype; kernel computes in it,
                        accumulates in f32)
    weight: (F, nx)     PyTorch nn.Linear layout (out_features, in_features)
    bias:   (F,)
    ny:     tuple       output "state shape", F == prod(ny)
    block_rows:        target batch tile (rows per grid step)
    min_pallas_rows:   below this batch size, use a plain XLA dot instead of a
                       standalone kernel launch (launch + DMA setup >> work)
    force_pallas:      always take the Pallas path (for testing)
    """
    B, nx = x.shape
    F = weight.shape[0]
    out_dtype = x.dtype
    out_shape = (B,) + tuple(ny)

    # Tiny-batch regime: a standalone pallas_call costs multiple us for
    # sub-us of work — keep it as a fused XLA dot in the surrounding graph.
    if not force_pallas and B < min_pallas_rows:
        y = (jnp.dot(x, weight.T.astype(x.dtype),
                     preferred_element_type=jnp.float32)
             + bias.astype(jnp.float32)).astype(out_dtype)
        return y.reshape(out_shape)

    itemsize = jnp.dtype(x.dtype).itemsize
    # Sub-32-bit dtypes pack along sublanes: bf16 native tile is (16,128),
    # int8/fp8 (32,128) — round the batch tile accordingly.
    mult = max(8, 32 // itemsize)

    # Batch tile: large, to amortize the ~0.35 us per-grid-step overhead
    # (per-row footprint is only (nx+F)*itemsize bytes, so thousands of rows
    # per tile is still a small DMA).
    tm = _round_up(max(block_rows, mult), mult)

    # v7x: dimension_semantics=("parallel",) only helps if the grid has >= 2
    # steps to shard across the 2 TensorCores — aim for >= 4 steps once each
    # step would still carry >= ~512 rows. Neutral on v5e/v6e (1 TC).
    if B >= 4 * 512:
        tm = min(tm, _round_up(pl.cdiv(B, 4), mult))

    # Never tile beyond the (rounded-up) batch itself.
    tm = min(tm, _round_up(B, mult))

    # VMEM guardrail: double-buffered x/out tiles + resident weight/bias must
    # fit comfortably on every generation (v7x: 64 MiB physical / 32 MiB
    # scoped default; v5e scoped default is only 16 MiB).
    per_row = (nx + F) * itemsize
    max_tm = max(mult, (((48 << 20) // (2 * per_row)) // mult) * mult)
    tm = min(tm, max_tm)

    tile_bytes = 2 * tm * per_row + F * nx * itemsize + F * 4
    vmem_limit = None
    if tile_bytes > (12 << 20):            # would exceed v5e's 16 MiB scoped default
        vmem_limit = min(tile_bytes + (8 << 20), 56 << 20)

    grid = (pl.cdiv(B, tm),)   # ragged last block: Pallas masks the partial tile

    w_in = weight.astype(x.dtype)                  # tiny (F*nx) cast; x is NOT re-cast
    b2d = bias.reshape(1, F).astype(jnp.float32)   # added in the f32 accumulator

    # TODO(synk): F = prod(ny) = 16 keeps the output store 16/128-lane masked and
    # uses only a 32x16 corner of the MXU; the only way past that structural limit
    # is fusing this projection into the producer kernel (or batching several such
    # heads so the output last dim is >= 128). At these shapes the op is
    # DMA/overhead-bound, so we accept it.
    out = pl.pallas_call(
        _linear_kernel,
        out_shape=jax.ShapeDtypeStruct((B, F), out_dtype),
        grid=grid,
        in_specs=[
            pl.BlockSpec((tm, nx), lambda i: (i, 0)),   # x: tiled on batch
            pl.BlockSpec((F, nx), lambda i: (0, 0)),    # weight: resident
            pl.BlockSpec((1, F), lambda i: (0, 0)),     # bias: resident
        ],
        out_specs=pl.BlockSpec((tm, F), lambda i: (i, 0)),
        compiler_params=pltpu.CompilerParams(
            dimension_semantics=("parallel",),   # independent batch tiles -> TC sharding
            vmem_limit_bytes=vmem_limit,
        ),
    )(x, w_in, b2d)

    return out.reshape(out_shape)               # .view(x.shape[0], *ny)


if __name__ == "__main__":
    # Module config: nx input features, ny = (4, 4) output "state shape"
    nx = 32
    ny = (4, 4)
    F = int(math.prod(ny))

    key = jax.random.PRNGKey(0)
    k_x, k_w, k_b = jax.random.split(key, 3)

    # Deterministic synthetic parameters matching nn.Linear's init range
    # U(-1/sqrt(nx), 1/sqrt(nx)); PyTorch layout weight: (out_features, in_features)
    bound = 1.0 / math.sqrt(nx)
    weight = jax.random.uniform(k_w, (F, nx), jnp.float32, -bound, bound)
    bias = jax.random.uniform(k_b, (F,), jnp.float32, -bound, bound)

    # 1) Moderate batch -> tiled Pallas grid with >= 4 steps (both TCs on v7x)
    B = 4096
    x = jax.random.normal(k_x, (B, nx), jnp.float32)
    y_ref = (x @ weight.T + bias).reshape((B,) + ny)
    y = jax.block_until_ready(linear_output_net_forward(x, weight, bias, ny))
    assert y.shape == (B,) + ny
    assert jnp.allclose(y, y_ref, atol=1e-5, rtol=1e-5)

    # 2) Ragged small batch forced through the kernel: partial last block is
    #    masked by Pallas — no wrapper-side pad or slice copies.
    xb = x[:37]
    y2 = jax.block_until_ready(
        linear_output_net_forward(xb, weight, bias, ny, block_rows=16,
                                  force_pallas=True))
    assert y2.shape == (37,) + ny
    assert jnp.allclose(y2, y_ref[:37], atol=1e-5, rtol=1e-5)

    # 3) Caller-provided bf16 inputs (no wrapper cast of x); f32 accumulation
    #    and f32 bias add kept inside the kernel; tile rounded to 16 rows.
    xh = x[:64].astype(jnp.bfloat16)
    y3 = jax.block_until_ready(
        linear_output_net_forward(xh, weight, bias, ny, block_rows=32,
                                  force_pallas=True))
    assert y3.dtype == jnp.bfloat16 and y3.shape == (64,) + ny
    assert jnp.allclose(y3.astype(jnp.float32), y_ref[:64], atol=5e-2, rtol=5e-2)

    # 4) Tiny batch -> XLA-fallback dispatch (no standalone kernel launch)
    y4 = jax.block_until_ready(linear_output_net_forward(x[:5], weight, bias, ny))
    assert jnp.allclose(y4, y_ref[:5], atol=1e-5, rtol=1e-5)

    print("KERNEL_OK")
</pallas_src>

<mosaic_0001>
module attributes {stable_mosaic.version = 11 : i64} {
  func.func @_linear_kernel(%arg0: i32, %arg1: memref<1024x32xf32, #tpu.memory_space<vmem>>, %arg2: memref<16x32xf32, #tpu.memory_space<vmem>>, %arg3: memref<1x16xf32, #tpu.memory_space<vmem>>, %arg4: memref<1024x16xf32, #tpu.memory_space<vmem>>) attributes {dimension_semantics = [#tpu.dimension_semantics<parallel>], iteration_bounds = array<i64: 4>, scalar_prefetch = 0 : i64, scratch_operands = 0 : i64, tpu.core_type = #tpu.core_type<tc>, window_params = [{transform_indices = @transform_0, window_bounds = array<i64: 1024, 32>}, {pipeline_mode = #tpu.pipeline_mode<synchronous>, transform_indices = @transform_1, window_bounds = array<i64: 16, 32>}, {pipeline_mode = #tpu.pipeline_mode<synchronous>, transform_indices = @transform_2, window_bounds = array<i64: 1, 16>}, {transform_indices = @transform_3, window_bounds = array<i64: 1024, 16>}]} {
    %c0 = arith.constant 0 : index
    %c0_0 = arith.constant 0 : index
    %0 = vector.load %arg1[%c0, %c0_0] : memref<1024x32xf32, #tpu.memory_space<vmem>>, vector<1024x32xf32>
    %c0_1 = arith.constant 0 : index
    %c0_2 = arith.constant 0 : index
    %1 = vector.load %arg2[%c0_1, %c0_2] : memref<16x32xf32, #tpu.memory_space<vmem>>, vector<16x32xf32>
    %cst = arith.constant dense<0.000000e+00> : vector<1024x16xf32>
    %2 = tpu.matmul %0, %1, %cst {dimension_numbers = #tpu.dot_dimension_numbers<[1], [1], [0], [0], [0, 0, 1, 0], [], []>} : vector<1024x32xf32>, vector<16x32xf32>, vector<1024x16xf32> -> vector<1024x16xf32>
    %c0_3 = arith.constant 0 : index
    %c0_4 = arith.constant 0 : index
    %3 = vector.load %arg3[%c0_3, %c0_4] : memref<1x16xf32, #tpu.memory_space<vmem>>, vector<1x16xf32>
    %4 = vector.broadcast %3 : vector<1x16xf32> to vector<1024x16xf32>
    %5 = arith.addf %2, %4 : vector<1024x16xf32>
    %c0_5 = arith.constant 0 : index
    %c0_6 = arith.constant 0 : index
    %6 = vector.load %arg4[%c0_5, %c0_6] : memref<1024x16xf32, #tpu.memory_space<vmem>>, vector<1024x16xf32>
    tpu.vector_store %arg4[%c0_5, %c0_6], %5 {strides = array<i32>} : memref<1024x16xf32, #tpu.memory_space<vmem>>, vector<1024x16xf32>,
    return
  }
  func.func @transform_0(%arg0: i32) -> (i32, i32) {
    %c0_i32 = arith.constant 0 : i32
    %c0_i32_0 = arith.constant 0 : i32
    return %arg0, %c0_i32 : i32, i32
  }
  func.func @transform_1(%arg0: i32) -> (i32, i32) {
    %c0_i32 = arith.constant 0 : i32
    %c0_i32_0 = arith.constant 0 : i32
    %c0_i32_1 = arith.constant 0 : i32
    return %c0_i32, %c0_i32_0 : i32, i32
  }
  func.func @transform_2(%arg0: i32) -> (i32, i32) {
    %c0_i32 = arith.constant 0 : i32
    %c0_i32_0 = arith.constant 0 : i32
    %c0_i32_1 = arith.constant 0 : i32
    return %c0_i32, %c0_i32_0 : i32, i32
  }
  func.func @transform_3(%arg0: i32) -> (i32, i32) {
    %c0_i32 = arith.constant 0 : i32
    %c0_i32_0 = arith.constant 0 : i32
    return %arg0, %c0_i32 : i32, i32
  }
}

</mosaic_0001>

<llo_original>
// kernel: tpu_custom_call.1
$region0: #{tpu_custom_call.1}
  #allocation0 [shape = 'u32[]', space=smem, size = 0x4, offset = 0x4, fixed_abs, tag = 'smem constant byte address 0x4 - core index']
  #allocation1 [shape = 'u32[144,128]{1,0:T(1,128)}', space=vmem, size = 0x12000, scoped, tag = 'internal scratch']
  %s0 = inlined_call_operand.vmem [shape: f32[4096,32], index: 0, kind: input, shape index: {}]
  %s1 = inlined_call_operand.vmem [shape: f32[16,32], index: 1, kind: input, shape index: {}]
  %s2 = inlined_call_operand.vmem [shape: f32[1,16], index: 2, kind: input, shape index: {}]
  %s3 = inlined_call_operand.vmem [shape: f32[4096,16], index: 3, kind: output, shape index: {}]
  %s4 = sld [smem:[#allocation0]]
  $region45: #{tpu_custom_call.1} parent=0
    _
  %s6 = ssub.s32 1, %s4
  %s7 = scalar_select 0, %s6, %s4
  loop: start=0, step=1, limit=6
  $region2: #{tpu_custom_call.1} parent=0 // loop_pre_header
    _
  $region3: #{tpu_custom_call.1} parent=0 // loop_header
    %s9 = sphi 0, %s13
    %p10 = scmp.ge.s32.totalorder %s9, 6
    %s19 = sphi 0, %s21
    %s22 = sphi 0, %s19
    %s23 = sphi 0, %s22
    %s39 = sphi 0, %s23
    %s43 = sphi 0, %s43
    %s45 = sphi 0, %s43
    %s46 = sphi 0, %s45
    %s60 = sphi 0, %s46
    %s64 = sphi 0, %s64
    %s66 = sphi 0, %s64
    %s67 = sphi 0, %s66
    %s81 = sphi 0, %s67
    %s87 = sphi 0, %s89
    %s90 = sphi 0, %s87
    %s91 = sphi 0, %s90
    %s107 = sphi 0, %s91
  $region4: #{tpu_custom_call.1} parent=0 // loop_header_branch
    %12 = sbr.rel (%p10) target = $region8
  $region5: #{tpu_custom_call.1} parent=0 // loop_body
    %s14 = ssub.s32 %s9, 1
    %s15 = ssub.s32 %s9, 2
    %s16 = sadd.s32 %s9, 1
    %s17 = ssub.s32 %s9, %s16
    %p18 = scmp.eq.s32.totalorder %s17, 0
    %s20 = sadd.s32 %s19, 1
    %s21 = scalar_select %p18, %s19, %s20
    %p24 = pneg %p18
    %p25 = scmp.eq.s32.totalorder %s9, 3
    %p26 = por %p24, %p25
    %p27 = scmp.ne.s32.totalorder %s19, %s22
    %p28 = scmp.eq.s32.totalorder %s9, 0
    %p29 = por %p27, %p28
    %p30 = scmp.ne.s32.totalorder %s19, %s22
    %p31 = scmp.eq.s32.totalorder %s14, 3
    %p32 = por %p30, %p31
    %p33 = scmp.ne.s32.totalorder %s22, %s23
    %p34 = scmp.eq.s32.totalorder %s14, 0
    %p35 = por %p33, %p34
    %p36 = scmp.ne.s32.totalorder %s22, %s23
    %p37 = scmp.eq.s32.totalorder %s15, 3
    %p38 = por %p36, %p37
    %p40 = scmp.ne.s32.totalorder %s23, %s39
    %p41 = scmp.eq.s32.totalorder %s15, 0
    %p42 = por %p40, %p41
    %s44 = sadd.s32 %s43, 1
    %p47 = scmp.eq.s32.totalorder %s9, 3
    %p48 = scmp.ne.s32.totalorder %s43, %s45
    %p49 = scmp.eq.s32.totalorder %s9, 0
    %p50 = por %p48, %p49
    %p51 = scmp.ne.s32.totalorder %s43, %s45
    %p52 = scmp.eq.s32.totalorder %s14, 3
    %p53 = por %p51, %p52
    %p54 = scmp.ne.s32.totalorder %s45, %s46
    %p55 = scmp.eq.s32.totalorder %s14, 0
    %p56 = por %p54, %p55
    %p57 = scmp.ne.s32.totalorder %s45, %s46
    %p58 = scmp.eq.s32.totalorder %s15, 3
    %p59 = por %p57, %p58
    %p61 = scmp.ne.s32.totalorder %s46, %s60
    %p62 = scmp.eq.s32.totalorder %s15, 0
    %p63 = por %p61, %p62
    %s65 = sadd.s32 %s64, 1
    %p68 = scmp.eq.s32.totalorder %s9, 3
    %p69 = scmp.ne.s32.totalorder %s64, %s66
    %p70 = scmp.eq.s32.totalorder %s9, 0
    %p71 = por %p69, %p70
    %p72 = scmp.ne.s32.totalorder %s64, %s66
    %p73 = scmp.eq.s32.totalorder %s14, 3
    %p74 = por %p72, %p73
    %p75 = scmp.ne.s32.totalorder %s66, %s67
    %p76 = scmp.eq.s32.totalorder %s14, 0
    %p77 = por %p75, %p76
    %p78 = scmp.ne.s32.totalorder %s66, %s67
    %p79 = scmp.eq.s32.totalorder %s15, 3
    %p80 = por %p78, %p79
    %p82 = scmp.ne.s32.totalorder %s67, %s81
    %p83 = scmp.eq.s32.totalorder %s15, 0
    %p84 = por %p82, %p83
    %s85 = ssub.s32 %s9, %s16
    %p86 = scmp.eq.s32.totalorder %s85, 0
    %s88 = sadd.s32 %s87, 1
    %s89 = scalar_select %p86, %s87, %s88
    %p92 = pneg %p86
    %p93 = scmp.eq.s32.totalorder %s9, 3
    %p94 = por %p92, %p93
    %p95 = scmp.ne.s32.totalorder %s87, %s90
    %p96 = scmp.eq.s32.totalorder %s9, 0
    %p97 = por %p95, %p96
    %p98 = scmp.ne.s32.totalorder %s87, %s90
    %p99 = scmp.eq.s32.totalorder %s14, 3
    %p100 = por %p98, %p99
    %p101 = scmp.ne.s32.totalorder %s90, %s91
    %p102 = scmp.eq.s32.totalorder %s14, 0
    %p103 = por %p101, %p102
    %p104 = scmp.ne.s32.totalorder %s90, %s91
    %p105 = scmp.eq.s32.totalorder %s15, 3
    %p106 = por %p104, %p105
    %p108 = scmp.ne.s32.totalorder %s91, %s107
    %p109 = scmp.eq.s32.totalorder %s15, 0
    %p110 = por %p108, %p109
    %p111 = scmp.le.s32.totalorder 1, %s9
    %p112 = scmp.lt.s32.totalorder %s9, 5
    %p113 = pnand %p111, %p112
    %p114 = pneg %p113
    // Predicated region
    $region9: #{tpu_custom_call.1} parent=5 // pred_check
      _
    $region10: #{tpu_custom_call.1} parent=5 // pred_check_branch
      %116 = sbr.rel (%p113) target = $region12
    $region11: #{tpu_custom_call.1} parent=5 // pred_region
      %s117 = ssub.s32 %s9, 1
      // Predicated region
      $region13: #{tpu_custom_call.1} parent=11 // pred_check
        %p118 = pneg %p56
      $region14: #{tpu_custom_call.1} parent=11 // pred_check_branch
        %120 = sbr.rel (%p118) target = $region16
      $region15: #{tpu_custom_call.1} parent=11 // pred_region
        _
      $region16: #{tpu_custom_call.1} parent=11 // pred_fallthru
        _
      // Predicated region
      $region17: #{tpu_custom_call.1} parent=11 // pred_check
        %p121 = pneg %p77
      $region18: #{tpu_custom_call.1} parent=11 // pred_check_branch
        %123 = sbr.rel (%p121) target = $region20
      $region19: #{tpu_custom_call.1} parent=11 // pred_region
        _
      $region20: #{tpu_custom_call.1} parent=11 // pred_fallthru
        _
    $region12: #{tpu_custom_call.1} parent=5 // pred_fallthru
      _
    %p124 = scmp.lt.s32.totalorder %s9, 4
    // Predicated region
    $region21: #{tpu_custom_call.1} parent=5 // pred_check
      %p125 = pneg %p124
    $region22: #{tpu_custom_call.1} parent=5 // pred_check_branch
      %127 = sbr.rel (%p125) target = $region24
    $region23: #{tpu_custom_call.1} parent=5 // pred_region
      // Predicated region
      $region25: #{tpu_custom_call.1} parent=23 // pred_check
        %p128 = pneg %p29
      $region26: #{tpu_custom_call.1} parent=23 // pred_check_branch
        %130 = sbr.rel (%p128) target = $region28
      $region27: #{tpu_custom_call.1} parent=23 // pred_region
        %s131 = smul.u32 128, %s9
        %p132 = scmp.lt.s32.totalorder %s131, 511
        %s133 = scalar_select %p132, %s131, 511
        %s134 = smul.addr %s133, 8
        %s135 = scalar_lea.vmem %s0, %s134
        %s136 = smul.u32 128, %s9
      $region28: #{tpu_custom_call.1} parent=23 // pred_fallthru
        _
    $region24: #{tpu_custom_call.1} parent=5 // pred_fallthru
      _
    %p137 = scmp.le.s32.totalorder 1, %s9
    %p138 = scmp.lt.s32.totalorder %s9, 5
    %p139 = pnand %p137, %p138
    %p140 = pneg %p139
    // Predicated region
    $region29: #{tpu_custom_call.1} parent=5 // pred_check
      _
    $region30: #{tpu_custom_call.1} parent=5 // pred_check_branch
      %142 = sbr.rel (%p139) target = $region32
    $region31: #{tpu_custom_call.1} parent=5 // pred_region
      %s143 = ssub.s32 %s9, 1
      %s144 = smul.u32 128, %s14
      %p145 = scmp.lt.s32.totalorder %s144, 511
      %s146 = scalar_select %p145, %s144, 511
      %s147 = smul.addr %s146, 8
      %s148 = scalar_lea.vmem %s0, %s147
      %p149 = pneg %p35
      %p150 = pneg %p32
      %p151 = pneg %p56
      %p152 = pneg %p53
      %p153 = pneg %p77
      %p154 = pneg %p74
      %p155 = pneg %p103
      %p156 = pneg %p100
      %s157 = smul.u32 128, %s14
      %p158 = scmp.lt.s32.totalorder %s157, 511
      %s159 = scalar_select %p158, %s157, 511
      %s160 = smul.addr %s159, 8
      %s161 = scalar_lea.vmem %s3, %s160
      %s162 = smul.u32 128, %s14
      %p163 = scmp.lt.s32.totalorder %s162, 511
      %s164 = scalar_select %p163, %s162, 511
      %s165 = smul.addr %s164, 8
      %s166 = scalar_lea.vmem %s0, %s165
      %s167 = smul.u32 128, %s14
      %s168 = smul.u32 128, %s14
      %p169 = scmp.lt.s32.totalorder %s168, 511
      %s170 = scalar_select %p169, %s168, 511
      %s171 = smul.addr %s170, 8
      %s172 = scalar_lea.vmem %s3, %s171
      %s173 = smul.u32 128, %s14
      %v174 = vld [vmem:[%s166] sm:$0xff]
      %v175 = vld [vmem:[%s166 + $0x8] sm:$0xff]
      %v176 = vld [vmem:[%s166 + $0x10] sm:$0xff]
      %v177 = vld [vmem:[%s166 + $0x18] sm:$0xff]
      %v178 = vld [vmem:[%s166 + $0x20] sm:$0xff]
      %v179 = vld [vmem:[%s166 + $0x28] sm:$0xff]
      %v180 = vld [vmem:[%s166 + $0x30] sm:$0xff]
      %v181 = vld [vmem:[%s166 + $0x38] sm:$0xff]
      %v182 = vld [vmem:[%s166 + $0x40] sm:$0xff]
      %v183 = vld [vmem:[%s166 + $0x48] sm:$0xff]
      %v184 = vld [vmem:[%s166 + $0x50] sm:$0xff]
      %v185 = vld [vmem:[%s166 + $0x58] sm:$0xff]
      %v186 = vld [vmem:[%s166 + $0x60] sm:$0xff]
      %v187 = vld [vmem:[%s166 + $0x68] sm:$0xff]
      %v188 = vld [vmem:[%s166 + $0x70] sm:$0xff]
      %v189 = vld [vmem:[%s166 + $0x78] sm:$0xff]
      %v190 = vld [vmem:[%s166 + $0x80] sm:$0xff]
      %v191 = vld [vmem:[%s166 + $0x88] sm:$0xff]
      %v192 = vld [vmem:[%s166 + $0x90] sm:$0xff]
      %v193 = vld [vmem:[%s166 + $0x98] sm:$0xff]
      %v194 = vld [vmem:[%s166 + $0xa0] sm:$0xff]
      %v195 = vld [vmem:[%s166 + $0xa8] sm:$0xff]
      %v196 = vld [vmem:[%s166 + $0xb0] sm:$0xff]
      %v197 = vld [vmem:[%s166 + $0xb8] sm:$0xff]
      %v198 = vld [vmem:[%s166 + $0xc0] sm:$0xff]
      %v199 = vld [vmem:[%s166 + $0xc8] sm:$0xff]
      %v200 = vld [vmem:[%s166 + $0xd0] sm:$0xff]
      %v201 = vld [vmem:[%s166 + $0xd8] sm:$0xff]
      %v202 = vld [vmem:[%s166 + $0xe0] sm:$0xff]
      %v203 = vld [vmem:[%s166 + $0xe8] sm:$0xff]
      %v204 = vld [vmem:[%s166 + $0xf0] sm:$0xff]
      %v205 = vld [vmem:[%s166 + $0xf8] sm:$0xff]
      %v206 = vld [vmem:[%s166 + $0x100] sm:$0xff]
      %v207 = vld [vmem:[%s166 + $0x108] sm:$0xff]
      %v208 = vld [vmem:[%s166 + $0x110] sm:$0xff]
      %v209 = vld [vmem:[%s166 + $0x118] sm:$0xff]
      %v210 = vld [vmem:[%s166 + $0x120] sm:$0xff]
      %v211 = vld [vmem:[%s166 + $0x128] sm:$0xff]
      %v212 = vld [vmem:[%s166 + $0x130] sm:$0xff]
      %v213 = vld [vmem:[%s166 + $0x138] sm:$0xff]
      %v214 = vld [vmem:[%s166 + $0x140] sm:$0xff]
      %v215 = vld [vmem:[%s166 + $0x148] sm:$0xff]
      %v216 = vld [vmem:[%s166 + $0x150] sm:$0xff]
      %v217 = vld [vmem:[%s166 + $0x158] sm:$0xff]
      %v218 = vld [vmem:[%s166 + $0x160] sm:$0xff]
      %v219 = vld [vmem:[%s166 + $0x168] sm:$0xff]
      %v220 = vld [vmem:[%s166 + $0x170] sm:$0xff]
      %v221 = vld [vmem:[%s166 + $0x178] sm:$0xff]
      %v222 = vld [vmem:[%s166 + $0x180] sm:$0xff]
      %v223 = vld [vmem:[%s166 + $0x188] sm:$0xff]
      %v224 = vld [vmem:[%s166 + $0x190] sm:$0xff]
      %v225 = vld [vmem:[%s166 + $0x198] sm:$0xff]
      %v226 = vld [vmem:[%s166 + $0x1a0] sm:$0xff]
      %v227 = vld [vmem:[%s166 + $0x1a8] sm:$0xff]
      %v228 = vld [vmem:[%s166 + $0x1b0] sm:$0xff]
      %v229 = vld [vmem:[%s166 + $0x1b8] sm:$0xff]
      %v230 = vld [vmem:[%s166 + $0x1c0] sm:$0xff]
      %v231 = vld [vmem:[%s166 + $0x1c8] sm:$0xff]
      %v232 = vld [vmem:[%s166 + $0x1d0] sm:$0xff]
      %v233 = vld [vmem:[%s166 + $0x1d8] sm:$0xff]
      %v234 = vld [vmem:[%s166 + $0x1e0] sm:$0xff]
      %v235 = vld [vmem:[%s166 + $0x1e8] sm:$0xff]
      %v236 = vld [vmem:[%s166 + $0x1f0] sm:$0xff]
      %v237 = vld [vmem:[%s166 + $0x1f8] sm:$0xff]
      %v238 = vld [vmem:[%s166 + $0x200] sm:$0xff]
      %v239 = vld [vmem:[%s166 + $0x208] sm:$0xff]
      %v240 = vld [vmem:[%s166 + $0x210] sm:$0xff]
      %v241 = vld [vmem:[%s166 + $0x218] sm:$0xff]
      %v242 = vld [vmem:[%s166 + $0x220] sm:$0xff]
      %v243 = vld [vmem:[%s166 + $0x228] sm:$0xff]
      %v244 = vld [vmem:[%s166 + $0x230] sm:$0xff]
      %v245 = vld [vmem:[%s166 + $0x238] sm:$0xff]
      %v246 = vld [vmem:[%s166 + $0x240] sm:$0xff]
      %v247 = vld [vmem:[%s166 + $0x248] sm:$0xff]
      %v248 = vld [vmem:[%s166 + $0x250] sm:$0xff]
      %v249 = vld [vmem:[%s166 + $0x258] sm:$0xff]
      %v250 = vld [vmem:[%s166 + $0x260] sm:$0xff]
      %v251 = vld [vmem:[%s166 + $0x268] sm:$0xff]
      %v252 = vld [vmem:[%s166 + $0x270] sm:$0xff]
      %v253 = vld [vmem:[%s166 + $0x278] sm:$0xff]
      %v254 = vld [vmem:[%s166 + $0x280] sm:$0xff]
      %v255 = vld [vmem:[%s166 + $0x288] sm:$0xff]
      %v256 = vld [vmem:[%s166 + $0x290] sm:$0xff]
      %v257 = vld [vmem:[%s166 + $0x298] sm:$0xff]
      %v258 = vld [vmem:[%s166 + $0x2a0] sm:$0xff]
      %v259 = vld [vmem:[%s166 + $0x2a8] sm:$0xff]
      %v260 = vld [vmem:[%s166 + $0x2b0] sm:$0xff]
      %v261 = vld [vmem:[%s166 + $0x2b8] sm:$0xff]
      %v262 = vld [vmem:[%s166 + $0x2c0] sm:$0xff]
      %v263 = vld [vmem:[%s166 + $0x2c8] sm:$0xff]
      %v264 = vld [vmem:[%s166 + $0x2d0] sm:$0xff]
      %v265 = vld [vmem:[%s166 + $0x2d8] sm:$0xff]
      %v266 = vld [vmem:[%s166 + $0x2e0] sm:$0xff]
      %v267 = vld [vmem:[%s166 + $0x2e8] sm:$0xff]
      %v268 = vld [vmem:[%s166 + $0x2f0] sm:$0xff]
      %v269 = vld [vmem:[%s166 + $0x2f8] sm:$0xff]
      %v270 = vld [vmem:[%s166 + $0x300] sm:$0xff]
      %v271 = vld [vmem:[%s166 + $0x308] sm:$0xff]
      %v272 = vld [vmem:[%s166 + $0x310] sm:$0xff]
      %v273 = vld [vmem:[%s166 + $0x318] sm:$0xff]
      %v274 = vld [vmem:[%s166 + $0x320] sm:$0xff]
      %v275 = vld [vmem:[%s166 + $0x328] sm:$0xff]
      %v276 = vld [vmem:[%s166 + $0x330] sm:$0xff]
      %v277 = vld [vmem:[%s166 + $0x338] sm:$0xff]
      %v278 = vld [vmem:[%s166 + $0x340] sm:$0xff]
      %v279 = vld [vmem:[%s166 + $0x348] sm:$0xff]
      %v280 = vld [vmem:[%s166 + $0x350] sm:$0xff]
      %v281 = vld [vmem:[%s166 + $0x358] sm:$0xff]
      %v282 = vld [vmem:[%s166 + $0x360] sm:$0xff]
      %v283 = vld [vmem:[%s166 + $0x368] sm:$0xff]
      %v284 = vld [vmem:[%s166 + $0x370] sm:$0xff]
      %v285 = vld [vmem:[%s166 + $0x378] sm:$0xff]
      %v286 = vld [vmem:[%s166 + $0x380] sm:$0xff]
      %v287 = vld [vmem:[%s166 + $0x388] sm:$0xff]
      %v288 = vld [vmem:[%s166 + $0x390] sm:$0xff]
      %v289 = vld [vmem:[%s166 + $0x398] sm:$0xff]
      %v290 = vld [vmem:[%s166 + $0x3a0] sm:$0xff]
      %v291 = vld [vmem:[%s166 + $0x3a8] sm:$0xff]
      %v292 = vld [vmem:[%s166 + $0x3b0] sm:$0xff]
      %v293 = vld [vmem:[%s166 + $0x3b8] sm:$0xff]
      %v294 = vld [vmem:[%s166 + $0x3c0] sm:$0xff]
      %v295 = vld [vmem:[%s166 + $0x3c8] sm:$0xff]
      %v296 = vld [vmem:[%s166 + $0x3d0] sm:$0xff]
      %v297 = vld [vmem:[%s166 + $0x3d8] sm:$0xff]
      %v298 = vld [vmem:[%s166 + $0x3e0] sm:$0xff]
      %v299 = vld [vmem:[%s166 + $0x3e8] sm:$0xff]
      %v300 = vld [vmem:[%s166 + $0x3f0] sm:$0xff]
      %v301 = vld [vmem:[%s166 + $0x3f8] sm:$0xff]
      %v302 = vld [vmem:[%s1] sm:$0xff]
      %v303 = vld [vmem:[%s1 + $0x8] sm:$0xff]
      %v304 = vld [vmem:[%s2] sm:$0x1]
      %v306 = vlaneseq
      %v307 = vshrl.u32 %v306, 7
      %v308 = vsub.s32 0, %v307
      %v309 = vrot.slane %v304, %v308
      %vm311 = vcmask 261120
      %v313 = vsel %vm311, %v174, 0
      %v316 = vsel %vm311, %v175, 0
      %v319 = vsel %vm311, %v176, 0
      %v322 = vsel %vm311, %v177, 0
      %v325 = vsel %vm311, %v178, 0
      %v328 = vsel %vm311, %v179, 0
      %v331 = vsel %vm311, %v180, 0
      %v334 = vsel %vm311, %v181, 0
      %v337 = vsel %vm311, %v182, 0
      %v340 = vsel %vm311, %v183, 0
      %v343 = vsel %vm311, %v184, 0
      %v346 = vsel %vm311, %v185, 0
      %v349 = vsel %vm311, %v186, 0
      %v352 = vsel %vm311, %v187, 0
      %v355 = vsel %vm311, %v188, 0
      %v358 = vsel %vm311, %v189, 0
      %v361 = vsel %vm311, %v190, 0
      %v364 = vsel %vm311, %v191, 0
      %v367 = vsel %vm311, %v192, 0
      %v370 = vsel %vm311, %v193, 0
      %v373 = vsel %vm311, %v194, 0
      %v376 = vsel %vm311, %v195, 0
      %v379 = vsel %vm311, %v196, 0
      %v382 = vsel %vm311, %v197, 0
      %v385 = vsel %vm311, %v198, 0
      %v388 = vsel %vm311, %v199, 0
      %v391 = vsel %vm311, %v200, 0
      %v394 = vsel %vm311, %v201, 0
      %v397 = vsel %vm311, %v202, 0
      %v400 = vsel %vm311, %v203, 0
      %v403 = vsel %vm311, %v204, 0
      %v406 = vsel %vm311, %v205, 0
      %v409 = vsel %vm311, %v206, 0
      %v412 = vsel %vm311, %v207, 0
      %v415 = vsel %vm311, %v208, 0
      %v418 = vsel %vm311, %v209, 0
      %v421 = vsel %vm311, %v210, 0
      %v424 = vsel %vm311, %v211, 0
      %v427 = vsel %vm311, %v212, 0
      %v430 = vsel %vm311, %v213, 0
      %v433 = vsel %vm311, %v214, 0
      %v436 = vsel %vm311, %v215, 0
      %v439 = vsel %vm311, %v216, 0
      %v442 = vsel %vm311, %v217, 0
      %v445 = vsel %vm311, %v218, 0
      %v448 = vsel %vm311, %v219, 0
      %v451 = vsel %vm311, %v220, 0
      %v454 = vsel %vm311, %v221, 0
      %v457 = vsel %vm311, %v222, 0
      %v460 = vsel %vm311, %v223, 0
      %v463 = vsel %vm311, %v224, 0
      %v466 = vsel %vm311, %v225, 0
      %v469 = vsel %vm311, %v226, 0
      %v472 = vsel %vm311, %v227, 0
      %v475 = vsel %vm311, %v228, 0
      %v478 = vsel %vm311, %v229, 0
      %v481 = vsel %vm311, %v230, 0
      %v484 = vsel %vm311, %v231, 0
      %v487 = vsel %vm311, %v232, 0
      %v490 = vsel %vm311, %v233, 0
      %v493 = vsel %vm311, %v234, 0
      %v496 = vsel %vm311, %v235, 0
      %v499 = vsel %vm311, %v236, 0
      %v502 = vsel %vm311, %v237, 0
      %v505 = vsel %vm311, %v238, 0
      %v508 = vsel %vm311, %v239, 0
      %v511 = vsel %vm311, %v240, 0
      %v514 = vsel %vm311, %v241, 0
      %v517 = vsel %vm311, %v242, 0
      %v520 = vsel %vm311, %v243, 0
      %v523 = vsel %vm311, %v244, 0
      %v526 = vsel %vm311, %v245, 0
      %v529 = vsel %vm311, %v246, 0
      %v532 = vsel %vm311, %v247, 0
      %v535 = vsel %vm311, %v248, 0
      %v538 = vsel %vm311, %v249, 0
      %v541 = vsel %vm311, %v250, 0
      %v544 = vsel %vm311, %v251, 0
      %v547 = vsel %vm311, %v252, 0
      %v550 = vsel %vm311, %v253, 0
      %v553 = vsel %vm311, %v254, 0
      %v556 = vsel %vm311, %v255, 0
      %v559 = vsel %vm311, %v256, 0
      %v562 = vsel %vm311, %v257, 0
      %v565 = vsel %vm311, %v258, 0
      %v568 = vsel %vm311, %v259, 0
      %v571 = vsel %vm311, %v260, 0
      %v574 = vsel %vm311, %v261, 0
      %v577 = vsel %vm311, %v262, 0
      %v580 = vsel %vm311, %v263, 0
      %v583 = vsel %vm311, %v264, 0
      %v586 = vsel %vm311, %v265, 0
      %v589 = vsel %vm311, %v266, 0
      %v592 = vsel %vm311, %v267, 0
      %v595 = vsel %vm311, %v268, 0
      %v598 = vsel %vm311, %v269, 0
      %v601 = vsel %vm311, %v270, 0
      %v604 = vsel %vm311, %v271, 0
      %v607 = vsel %vm311, %v272, 0
      %v610 = vsel %vm311, %v273, 0
      %v613 = vsel %vm311, %v274, 0
      %v616 = vsel %vm311, %v275, 0
      %v619 = vsel %vm311, %v276, 0
      %v622 = vsel %vm311, %v277, 0
      %v625 = vsel %vm311, %v278, 0
      %v628 = vsel %vm311, %v279, 0
      %v631 = vsel %vm311, %v280, 0
      %v634 = vsel %vm311, %v281, 0
      %v637 = vsel %vm311, %v282, 0
      %v640 = vsel %vm311, %v283, 0
      %v643 = vsel %vm311, %v284, 0
      %v646 = vsel %vm311, %v285, 0
      %v649 = vsel %vm311, %v286, 0
      %v652 = vsel %vm311, %v287, 0
      %v655 = vsel %vm311, %v288, 0
      %v658 = vsel %vm311, %v289, 0
      %v661 = vsel %vm311, %v290, 0
      %v664 = vsel %vm311, %v291, 0
      %v667 = vsel %vm311, %v292, 0
      %v670 = vsel %vm311, %v293, 0
      %v673 = vsel %vm311, %v294, 0
      %v676 = vsel %vm311, %v295, 0
      %v679 = vsel %vm311, %v296, 0
      %v682 = vsel %vm311, %v297, 0
      %v685 = vsel %vm311, %v298, 0
      %v688 = vsel %vm311, %v299, 0
      %v691 = vsel %vm311, %v300, 0
      %v694 = vsel %vm311, %v301, 0
      %v697 = vsel %vm311, %v302, 0
      %v700 = vsel %vm311, %v303, 0
      %702 = vmatprep.subr.mxu0 0.0
      %703 = vmatpush1.xpose.msra.mxu0 0.0
      %704 = vmatprep.subr.mxu0 0.0
      %705 = vmatpush1.xpose.msra.mxu0 0.0
      %706 = vmatprep.subr.mxu0 0.0
      %707 = vmatpush1.xpose.msra.mxu0 0.0
      %708 = vmatprep.subr.mxu0 0.0
      %709 = vmatpush1.xpose.msra.mxu0 0.0
      %710 = vmatprep.subr.mxu0 0.0
      %711 = vmatpush1.xpose.msra.mxu0 0.0
      %712 = vmatprep.subr.mxu0 0.0
      %713 = vmatpush1.xpose.msra.mxu0 0.0
      %714 = vmatprep.subr.mxu0 0.0
      %715 = vmatpush1.xpose.msra.mxu0 0.0
      %716 = vmatprep.subr.mxu0 0.0
      %717 = vmatpush1.xpose.msra.mxu0 0.0
      %718 = vmatprep.subr.mxu0 0.0
      %719 = vmatpush1.xpose.msra.mxu0 0.0
      %720 = vmatprep.subr.mxu0 0.0
      %721 = vmatpush1.xpose.msra.mxu0 0.0
      %722 = vmatprep.subr.mxu0 0.0
      %723 = vmatpush1.xpose.msra.mxu0 0.0
      %724 = vmatprep.subr.mxu0 0.0
      %725 = vmatpush1.xpose.msra.mxu0 0.0
      %726 = vmatprep.subr.mxu0 0.0
      %727 = vmatpush1.xpose.msra.mxu0 0.0
      %728 = vmatprep.subr.mxu0 0.0
      %729 = vmatpush1.xpose.msra.mxu0 0.0
      %730 = vmatprep.subr.mxu0 0.0
      %731 = vmatpush1.xpose.msra.mxu0 %v700
      %732 = vmatprep.subr.mxu0 0.0
      %733 = vmatpush1.xpose.msra.mxu0 %v697
      %734 = vmatprep.subr.mxu0 0.0
      %735 = vmatpush2.xpose.msra.mxu0 0.0
      %736 = vmatprep.subr.mxu0 0.0
      %737 = vmatpush2.xpose.msra.mxu0 0.0
      %738 = vmatprep.subr.mxu0 0.0
      %739 = vmatpush2.xpose.msra.mxu0 0.0
      %740 = vmatprep.subr.mxu0 0.0
      %741 = vmatpush2.xpose.msra.mxu0 0.0
      %742 = vmatprep.subr.mxu0 0.0
      %743 = vmatpush2.xpose.msra.mxu0 0.0
      %744 = vmatprep.subr.mxu0 0.0
      %745 = vmatpush2.xpose.msra.mxu0 0.0
      %746 = vmatprep.subr.mxu0 0.0
      %747 = vmatpush2.xpose.msra.mxu0 0.0
      %748 = vmatprep.subr.mxu0 0.0
      %749 = vmatpush2.xpose.msra.mxu0 0.0
      %750 = vmatprep.subr.mxu0 0.0
      %751 = vmatpush2.xpose.msra.mxu0 0.0
      %752 = vmatprep.subr.mxu0 0.0
      %753 = vmatpush2.xpose.msra.mxu0 0.0
      %754 = vmatprep.subr.mxu0 0.0
      %755 = vmatpush2.xpose.msra.mxu0 0.0
      %756 = vmatprep.subr.mxu0 0.0
      %757 = vmatpush2.xpose.msra.mxu0 0.0
      %758 = vmatprep.subr.mxu0 0.0
      %759 = vmatpush2.xpose.msra.mxu0 0.0
      %760 = vmatprep.subr.mxu0 0.0
      %761 = vmatpush2.xpose.msra.mxu0 0.0
      %762 = vmatprep.subr.mxu0 0.0
      %763 = vmatpush2.xpose.msra.mxu0 0.0
      %764 = vmatprep.subr.mxu0 0.0
      %765 = vmatpush2.xpose.msra.mxu0 0.0
      %766 = vmatprep.mubr.f32.mxu0 0.0
      %767 = vmatmul.mubr.f32.gmra.mxu0 %v313
      %v768 = vpop.f32.mrf.mxu0
      %v769 = vadd.f32 %v309, %v768
      %v770 = vpop.f32.mrf.mxu0
      %771 = vmatprep.mubr.f32.mxu0 0.0
      %772 = vmatmul.mubr.f32.gmra.mxu0 %v316
      %v773 = vpop.f32.mrf.mxu0
      %v774 = vadd.f32 %v309, %v773
      %v775 = vpop.f32.mrf.mxu0
      %776 = vmatprep.mubr.f32.mxu0 0.0
      %777 = vmatmul.mubr.f32.gmra.mxu0 %v319
      %v778 = vpop.f32.mrf.mxu0
      %v779 = vadd.f32 %v309, %v778
      %v780 = vpop.f32.mrf.mxu0
      %781 = vmatprep.mubr.f32.mxu0 0.0
      %782 = vmatmul.mubr.f32.gmra.mxu0 %v322
      %v783 = vpop.f32.mrf.mxu0
      %v784 = vadd.f32 %v309, %v783
      %v785 = vpop.f32.mrf.mxu0
      %786 = vmatprep.mubr.f32.mxu0 0.0
      %787 = vmatmul.mubr.f32.gmra.mxu0 %v325
      %v788 = vpop.f32.mrf.mxu0
      %v789 = vadd.f32 %v309, %v788
      %v790 = vpop.f32.mrf.mxu0
      %791 = vmatprep.mubr.f32.mxu0 0.0
      %792 = vmatmul.mubr.f32.gmra.mxu0 %v328
      %v793 = vpop.f32.mrf.mxu0
      %v794 = vadd.f32 %v309, %v793
      %v795 = vpop.f32.mrf.mxu0
      %796 = vmatprep.mubr.f32.mxu0 0.0
      %797 = vmatmul.mubr.f32.gmra.mxu0 %v331
      %v798 = vpop.f32.mrf.mxu0
      %v799 = vadd.f32 %v309, %v798
      %v800 = vpop.f32.mrf.mxu0
      %801 = vmatprep.mubr.f32.mxu0 0.0
      %802 = vmatmul.mubr.f32.gmra.mxu0 %v334
      %v803 = vpop.f32.mrf.mxu0
      %v804 = vadd.f32 %v309, %v803
      %v805 = vpop.f32.mrf.mxu0
      %806 = vmatprep.mubr.f32.mxu0 0.0
      %807 = vmatmul.mubr.f32.gmra.mxu0 %v337
      %v808 = vpop.f32.mrf.mxu0
      %v809 = vadd.f32 %v309, %v808
      %v810 = vpop.f32.mrf.mxu0
      %811 = vmatprep.mubr.f32.mxu0 0.0
      %812 = vmatmul.mubr.f32.gmra.mxu0 %v340
      %v813 = vpop.f32.mrf.mxu0
      %v814 = vadd.f32 %v309, %v813
      %v815 = vpop.f32.mrf.mxu0
      %816 = vmatprep.mubr.f32.mxu0 0.0
      %817 = vmatmul.mubr.f32.gmra.mxu0 %v343
      %v818 = vpop.f32.mrf.mxu0
      %v819 = vadd.f32 %v309, %v818
      %v820 = vpop.f32.mrf.mxu0
      %821 = vmatprep.mubr.f32.mxu0 0.0
      %822 = vmatmul.mubr.f32.gmra.mxu0 %v346
      %v823 = vpop.f32.mrf.mxu0
      %v824 = vadd.f32 %v309, %v823
      %v825 = vpop.f32.mrf.mxu0
      %826 = vmatprep.mubr.f32.mxu0 0.0
      %827 = vmatmul.mubr.f32.gmra.mxu0 %v349
      %v828 = vpop.f32.mrf.mxu0
      %v829 = vadd.f32 %v309, %v828
      %v830 = vpop.f32.mrf.mxu0
      %831 = vmatprep.mubr.f32.mxu0 0.0
      %832 = vmatmul.mubr.f32.gmra.mxu0 %v352
      %v833 = vpop.f32.mrf.mxu0
      %v834 = vadd.f32 %v309, %v833
      %v835 = vpop.f32.mrf.mxu0
      %836 = vmatprep.mubr.f32.mxu0 0.0
      %837 = vmatmul.mubr.f32.gmra.mxu0 %v355
      %v838 = vpop.f32.mrf.mxu0
      %v839 = vadd.f32 %v309, %v838
      %v840 = vpop.f32.mrf.mxu0
      %841 = vmatprep.mubr.f32.mxu0 0.0
      %842 = vmatmul.mubr.f32.gmra.mxu0 %v358
      %v843 = vpop.f32.mrf.mxu0
      %v844 = vadd.f32 %v309, %v843
      %v845 = vpop.f32.mrf.mxu0
      %846 = vmatprep.mubr.f32.mxu0 0.0
      %847 = vmatmul.mubr.f32.gmra.mxu0 %v361
      %v848 = vpop.f32.mrf.mxu0
      %v849 = vadd.f32 %v309, %v848
      %v850 = vpop.f32.mrf.mxu0
      %851 = vmatprep.mubr.f32.mxu0 0.0
      %852 = vmatmul.mubr.f32.gmra.mxu0 %v364
      %v853 = vpop.f32.mrf.mxu0
      %v854 = vadd.f32 %v309, %v853
      %v855 = vpop.f32.mrf.mxu0
      %856 = vmatprep.mubr.f32.mxu0 0.0
      %857 = vmatmul.mubr.f32.gmra.mxu0 %v367
      %v858 = vpop.f32.mrf.mxu0
      %v859 = vadd.f32 %v309, %v858
      %v860 = vpop.f32.mrf.mxu0
      %861 = vmatprep.mubr.f32.mxu0 0.0
      %862 = vmatmul.mubr.f32.gmra.mxu0 %v370
      %v863 = vpop.f32.mrf.mxu0
      %v864 = vadd.f32 %v309, %v863
      %v865 = vpop.f32.mrf.mxu0
      %866 = vmatprep.mubr.f32.mxu0 0.0
      %867 = vmatmul.mubr.f32.gmra.mxu0 %v373
      %v868 = vpop.f32.mrf.mxu0
      %v869 = vadd.f32 %v309, %v868
      %v870 = vpop.f32.mrf.mxu0
      %871 = vmatprep.mubr.f32.mxu0 0.0
      %872 = vmatmul.mubr.f32.gmra.mxu0 %v376
      %v873 = vpop.f32.mrf.mxu0
      %v874 = vadd.f32 %v309, %v873
      %v875 = vpop.f32.mrf.mxu0
      %876 = vmatprep.mubr.f32.mxu0 0.0
      %877 = vmatmul.mubr.f32.gmra.mxu0 %v379
      %v878 = vpop.f32.mrf.mxu0
      %v879 = vadd.f32 %v309, %v878
      %v880 = vpop.f32.mrf.mxu0
      %881 = vmatprep.mubr.f32.mxu0 0.0
      %882 = vmatmul.mubr.f32.gmra.mxu0 %v382
      %v883 = vpop.f32.mrf.mxu0
      %v884 = vadd.f32 %v309, %v883
      %v885 = vpop.f32.mrf.mxu0
      %886 = vmatprep.mubr.f32.mxu0 0.0
      %887 = vmatmul.mubr.f32.gmra.mxu0 %v385
      %v888 = vpop.f32.mrf.mxu0
      %v889 = vadd.f32 %v309, %v888
      %v890 = vpop.f32.mrf.mxu0
      %891 = vmatprep.mubr.f32.mxu0 0.0
      %892 = vmatmul.mubr.f32.gmra.mxu0 %v388
      %v893 = vpop.f32.mrf.mxu0
      %v894 = vadd.f32 %v309, %v893
      %v895 = vpop.f32.mrf.mxu0
      %896 = vmatprep.mubr.f32.mxu0 0.0
      %897 = vmatmul.mubr.f32.gmra.mxu0 %v391
      %v898 = vpop.f32.mrf.mxu0
      %v899 = vadd.f32 %v309, %v898
      %v900 = vpop.f32.mrf.mxu0
      %901 = vmatprep.mubr.f32.mxu0 0.0
      %902 = vmatmul.mubr.f32.gmra.mxu0 %v394
      %v903 = vpop.f32.mrf.mxu0
      %v904 = vadd.f32 %v309, %v903
      %v905 = vpop.f32.mrf.mxu0
      %906 = vmatprep.mubr.f32.mxu0 0.0
      %907 = vmatmul.mubr.f32.gmra.mxu0 %v397
      %v908 = vpop.f32.mrf.mxu0
      %v909 = vadd.f32 %v309, %v908
      %v910 = vpop.f32.mrf.mxu0
      %911 = vmatprep.mubr.f32.mxu0 0.0
      %912 = vmatmul.mubr.f32.gmra.mxu0 %v400
      %v913 = vpop.f32.mrf.mxu0
      %v914 = vadd.f32 %v309, %v913
      %v915 = vpop.f32.mrf.mxu0
      %916 = vmatprep.mubr.f32.mxu0 0.0
      %917 = vmatmul.mubr.f32.gmra.mxu0 %v403
      %v918 = vpop.f32.mrf.mxu0
      %v919 = vadd.f32 %v309, %v918
      %v920 = vpop.f32.mrf.mxu0
      %921 = vmatprep.mubr.f32.mxu0 0.0
      %922 = vmatmul.mubr.f32.gmra.mxu0 %v406
      %v923 = vpop.f32.mrf.mxu0
      %v924 = vadd.f32 %v309, %v923
      %v925 = vpop.f32.mrf.mxu0
      %926 = vmatprep.mubr.f32.mxu0 0.0
      %927 = vmatmul.mubr.f32.gmra.mxu0 %v409
      %v928 = vpop.f32.mrf.mxu0
      %v929 = vadd.f32 %v309, %v928
      %v930 = vpop.f32.mrf.mxu0
      %931 = vmatprep.mubr.f32.mxu0 0.0
      %932 = vmatmul.mubr.f32.gmra.mxu0 %v412
      %v933 = vpop.f32.mrf.mxu0
      %v934 = vadd.f32 %v309, %v933
      %v935 = vpop.f32.mrf.mxu0
      %936 = vmatprep.mubr.f32.mxu0 0.0
      %937 = vmatmul.mubr.f32.gmra.mxu0 %v415
      %v938 = vpop.f32.mrf.mxu0
      %v939 = vadd.f32 %v309, %v938
      %v940 = vpop.f32.mrf.mxu0
      %941 = vmatprep.mubr.f32.mxu0 0.0
      %942 = vmatmul.mubr.f32.gmra.mxu0 %v418
      %v943 = vpop.f32.mrf.mxu0
      %v944 = vadd.f32 %v309, %v943
      %v945 = vpop.f32.mrf.mxu0
      %946 = vmatprep.mubr.f32.mxu0 0.0
      %947 = vmatmul.mubr.f32.gmra.mxu0 %v421
      %v948 = vpop.f32.mrf.mxu0
      %v949 = vadd.f32 %v309, %v948
      %v950 = vpop.f32.mrf.mxu0
      %951 = vmatprep.mubr.f32.mxu0 0.0
      %952 = vmatmul.mubr.f32.gmra.mxu0 %v424
      %v953 = vpop.f32.mrf.mxu0
      %v954 = vadd.f32 %v309, %v953
      %v955 = vpop.f32.mrf.mxu0
      %956 = vmatprep.mubr.f32.mxu0 0.0
      %957 = vmatmul.mubr.f32.gmra.mxu0 %v427
      %v958 = vpop.f32.mrf.mxu0
      %v959 = vadd.f32 %v309, %v958
      %v960 = vpop.f32.mrf.mxu0
      %961 = vmatprep.mubr.f32.mxu0 0.0
      %962 = vmatmul.mubr.f32.gmra.mxu0 %v430
      %v963 = vpop.f32.mrf.mxu0
      %v964 = vadd.f32 %v309, %v963
      %v965 = vpop.f32.mrf.mxu0
      %966 = vmatprep.mubr.f32.mxu0 0.0
      %967 = vmatmul.mubr.f32.gmra.mxu0 %v433
      %v968 = vpop.f32.mrf.mxu0
      %v969 = vadd.f32 %v309, %v968
      %v970 = vpop.f32.mrf.mxu0
      %971 = vmatprep.mubr.f32.mxu0 0.0
      %972 = vmatmul.mubr.f32.gmra.mxu0 %v436
      %v973 = vpop.f32.mrf.mxu0
      %v974 = vadd.f32 %v309, %v973
      %v975 = vpop.f32.mrf.mxu0
      %976 = vmatprep.mubr.f32.mxu0 0.0
      %977 = vmatmul.mubr.f32.gmra.mxu0 %v439
      %v978 = vpop.f32.mrf.mxu0
      %v979 = vadd.f32 %v309, %v978
      %v980 = vpop.f32.mrf.mxu0
      %981 = vmatprep.mubr.f32.mxu0 0.0
      %982 = vmatmul.mubr.f32.gmra.mxu0 %v442
      %v983 = vpop.f32.mrf.mxu0
      %v984 = vadd.f32 %v309, %v983
      %v985 = vpop.f32.mrf.mxu0
      %986 = vmatprep.mubr.f32.mxu0 0.0
      %987 = vmatmul.mubr.f32.gmra.mxu0 %v445
      %v988 = vpop.f32.mrf.mxu0
      %v989 = vadd.f32 %v309, %v988
      %v990 = vpop.f32.mrf.mxu0
      %991 = vmatprep.mubr.f32.mxu0 0.0
      %992 = vmatmul.mubr.f32.gmra.mxu0 %v448
      %v993 = vpop.f32.mrf.mxu0
      %v994 = vadd.f32 %v309, %v993
      %v995 = vpop.f32.mrf.mxu0
      %996 = vmatprep.mubr.f32.mxu0 0.0
      %997 = vmatmul.mubr.f32.gmra.mxu0 %v451
      %v998 = vpop.f32.mrf.mxu0
      %v999 = vadd.f32 %v309, %v998
      %v1000 = vpop.f32.mrf.mxu0
      %1001 = vmatprep.mubr.f32.mxu0 0.0
      %1002 = vmatmul.mubr.f32.gmra.mxu0 %v454
      %v1003 = vpop.f32.mrf.mxu0
      %v1004 = vadd.f32 %v309, %v1003
      %v1005 = vpop.f32.mrf.mxu0
      %1006 = vmatprep.mubr.f32.mxu0 0.0
      %1007 = vmatmul.mubr.f32.gmra.mxu0 %v457
      %v1008 = vpop.f32.mrf.mxu0
      %v1009 = vadd.f32 %v309, %v1008
      %v1010 = vpop.f32.mrf.mxu0
      %1011 = vmatprep.mubr.f32.mxu0 0.0
      %1012 = vmatmul.mubr.f32.gmra.mxu0 %v460
      %v1013 = vpop.f32.mrf.mxu0
      %v1014 = vadd.f32 %v309, %v1013
      %v1015 = vpop.f32.mrf.mxu0
      %1016 = vmatprep.mubr.f32.mxu0 0.0
      %1017 = vmatmul.mubr.f32.gmra.mxu0 %v463
      %v1018 = vpop.f32.mrf.mxu0
      %v1019 = vadd.f32 %v309, %v1018
      %v1020 = vpop.f32.mrf.mxu0
      %1021 = vmatprep.mubr.f32.mxu0 0.0
      %1022 = vmatmul.mubr.f32.gmra.mxu0 %v466
      %v1023 = vpop.f32.mrf.mxu0
      %v1024 = vadd.f32 %v309, %v1023
      %v1025 = vpop.f32.mrf.mxu0
      %1026 = vmatprep.mubr.f32.mxu0 0.0
      %1027 = vmatmul.mubr.f32.gmra.mxu0 %v469
      %v1028 = vpop.f32.mrf.mxu0
      %v1029 = vadd.f32 %v309, %v1028
      %v1030 = vpop.f32.mrf.mxu0
      %1031 = vmatprep.mubr.f32.mxu0 0.0
      %1032 = vmatmul.mubr.f32.gmra.mxu0 %v472
      %v1033 = vpop.f32.mrf.mxu0
      %v1034 = vadd.f32 %v309, %v1033
      %v1035 = vpop.f32.mrf.mxu0
      %1036 = vmatprep.mubr.f32.mxu0 0.0
      %1037 = vmatmul.mubr.f32.gmra.mxu0 %v475
      %v1038 = vpop.f32.mrf.mxu0
      %v1039 = vadd.f32 %v309, %v1038
      %v1040 = vpop.f32.mrf.mxu0
      %1041 = vmatprep.mubr.f32.mxu0 0.0
      %1042 = vmatmul.mubr.f32.gmra.mxu0 %v478
      %v1043 = vpop.f32.mrf.mxu0
      %v1044 = vadd.f32 %v309, %v1043
      %v1045 = vpop.f32.mrf.mxu0
      %1046 = vmatprep.mubr.f32.mxu0 0.0
      %1047 = vmatmul.mubr.f32.gmra.mxu0 %v481
      %v1048 = vpop.f32.mrf.mxu0
      %v1049 = vadd.f32 %v309, %v1048
      %v1050 = vpop.f32.mrf.mxu0
      %1051 = vmatprep.mubr.f32.mxu0 0.0
      %1052 = vmatmul.mubr.f32.gmra.mxu0 %v484
      %v1053 = vpop.f32.mrf.mxu0
      %v1054 = vadd.f32 %v309, %v1053
      %v1055 = vpop.f32.mrf.mxu0
      %1056 = vmatprep.mubr.f32.mxu0 0.0
      %1057 = vmatmul.mubr.f32.gmra.mxu0 %v487
      %v1058 = vpop.f32.mrf.mxu0
      %v1059 = vadd.f32 %v309, %v1058
      %v1060 = vpop.f32.mrf.mxu0
      %1061 = vmatprep.mubr.f32.mxu0 0.0
      %1062 = vmatmul.mubr.f32.gmra.mxu0 %v490
      %v1063 = vpop.f32.mrf.mxu0
      %v1064 = vadd.f32 %v309, %v1063
      %v1065 = vpop.f32.mrf.mxu0
      %1066 = vmatprep.mubr.f32.mxu0 0.0
      %1067 = vmatmul.mubr.f32.gmra.mxu0 %v493
      %v1068 = vpop.f32.mrf.mxu0
      %v1069 = vadd.f32 %v309, %v1068
      %v1070 = vpop.f32.mrf.mxu0
      %1071 = vmatprep.mubr.f32.mxu0 0.0
      %1072 = vmatmul.mubr.f32.gmra.mxu0 %v496
      %v1073 = vpop.f32.mrf.mxu0
      %v1074 = vadd.f32 %v309, %v1073
      %v1075 = vpop.f32.mrf.mxu0
      %1076 = vmatprep.mubr.f32.mxu0 0.0
      %1077 = vmatmul.mubr.f32.gmra.mxu0 %v499
      %v1078 = vpop.f32.mrf.mxu0
      %v1079 = vadd.f32 %v309, %v1078
      %v1080 = vpop.f32.mrf.mxu0
      %1081 = vmatprep.mubr.f32.mxu0 0.0
      %1082 = vmatmul.mubr.f32.gmra.mxu0 %v502
      %v1083 = vpop.f32.mrf.mxu0
      %v1084 = vadd.f32 %v309, %v1083
      %v1085 = vpop.f32.mrf.mxu0
      %1086 = vmatprep.mubr.f32.mxu0 0.0
      %1087 = vmatmul.mubr.f32.gmra.mxu0 %v505
      %v1088 = vpop.f32.mrf.mxu0
      %v1089 = vadd.f32 %v309, %v1088
      %v1090 = vpop.f32.mrf.mxu0
      %1091 = vmatprep.mubr.f32.mxu0 0.0
      %1092 = vmatmul.mubr.f32.gmra.mxu0 %v508
      %v1093 = vpop.f32.mrf.mxu0
      %v1094 = vadd.f32 %v309, %v1093
      %v1095 = vpop.f32.mrf.mxu0
      %1096 = vmatprep.mubr.f32.mxu0 0.0
      %1097 = vmatmul.mubr.f32.gmra.mxu0 %v511
      %v1098 = vpop.f32.mrf.mxu0
      %v1099 = vadd.f32 %v309, %v1098
      %v1100 = vpop.f32.mrf.mxu0
      %1101 = vmatprep.mubr.f32.mxu0 0.0
      %1102 = vmatmul.mubr.f32.gmra.mxu0 %v514
      %v1103 = vpop.f32.mrf.mxu0
      %v1104 = vadd.f32 %v309, %v1103
      %v1105 = vpop.f32.mrf.mxu0
      %1106 = vmatprep.mubr.f32.mxu0 0.0
      %1107 = vmatmul.mubr.f32.gmra.mxu0 %v517
      %v1108 = vpop.f32.mrf.mxu0
      %v1109 = vadd.f32 %v309, %v1108
      %v1110 = vpop.f32.mrf.mxu0
      %1111 = vmatprep.mubr.f32.mxu0 0.0
      %1112 = vmatmul.mubr.f32.gmra.mxu0 %v520
      %v1113 = vpop.f32.mrf.mxu0
      %v1114 = vadd.f32 %v309, %v1113
      %v1115 = vpop.f32.mrf.mxu0
      %1116 = vmatprep.mubr.f32.mxu0 0.0
      %1117 = vmatmul.mubr.f32.gmra.mxu0 %v523
      %v1118 = vpop.f32.mrf.mxu0
      %v1119 = vadd.f32 %v309, %v1118
      %v1120 = vpop.f32.mrf.mxu0
      %1121 = vmatprep.mubr.f32.mxu0 0.0
      %1122 = vmatmul.mubr.f32.gmra.mxu0 %v526
      %v1123 = vpop.f32.mrf.mxu0
      %v1124 = vadd.f32 %v309, %v1123
      %v1125 = vpop.f32.mrf.mxu0
      %1126 = vmatprep.mubr.f32.mxu0 0.0
      %1127 = vmatmul.mubr.f32.gmra.mxu0 %v529
      %v1128 = vpop.f32.mrf.mxu0
      %v1129 = vadd.f32 %v309, %v1128
      %v1130 = vpop.f32.mrf.mxu0
      %1131 = vmatprep.mubr.f32.mxu0 0.0
      %1132 = vmatmul.mubr.f32.gmra.mxu0 %v532
      %v1133 = vpop.f32.mrf.mxu0
      %v1134 = vadd.f32 %v309, %v1133
      %v1135 = vpop.f32.mrf.mxu0
      %1136 = vmatprep.mubr.f32.mxu0 0.0
      %1137 = vmatmul.mubr.f32.gmra.mxu0 %v535
      %v1138 = vpop.f32.mrf.mxu0
      %v1139 = vadd.f32 %v309, %v1138
      %v1140 = vpop.f32.mrf.mxu0
      %1141 = vmatprep.mubr.f32.mxu0 0.0
      %1142 = vmatmul.mubr.f32.gmra.mxu0 %v538
      %v1143 = vpop.f32.mrf.mxu0
      %v1144 = vadd.f32 %v309, %v1143
      %v1145 = vpop.f32.mrf.mxu0
      %1146 = vmatprep.mubr.f32.mxu0 0.0
      %1147 = vmatmul.mubr.f32.gmra.mxu0 %v541
      %v1148 = vpop.f32.mrf.mxu0
      %v1149 = vadd.f32 %v309, %v1148
      %v1150 = vpop.f32.mrf.mxu0
      %1151 = vmatprep.mubr.f32.mxu0 0.0
      %1152 = vmatmul.mubr.f32.gmra.mxu0 %v544
      %v1153 = vpop.f32.mrf.mxu0
      %v1154 = vadd.f32 %v309, %v1153
      %v1155 = vpop.f32.mrf.mxu0
      %1156 = vmatprep.mubr.f32.mxu0 0.0
      %1157 = vmatmul.mubr.f32.gmra.mxu0 %v547
      %v1158 = vpop.f32.mrf.mxu0
      %v1159 = vadd.f32 %v309, %v1158
      %v1160 = vpop.f32.mrf.mxu0
      %1161 = vmatprep.mubr.f32.mxu0 0.0
      %1162 = vmatmul.mubr.f32.gmra.mxu0 %v550
      %v1163 = vpop.f32.mrf.mxu0
      %v1164 = vadd.f32 %v309, %v1163
      %v1165 = vpop.f32.mrf.mxu0
      %1166 = vmatprep.mubr.f32.mxu0 0.0
      %1167 = vmatmul.mubr.f32.gmra.mxu0 %v553
      %v1168 = vpop.f32.mrf.mxu0
      %v1169 = vadd.f32 %v309, %v1168
      %v1170 = vpop.f32.mrf.mxu0
      %1171 = vmatprep.mubr.f32.mxu0 0.0
      %1172 = vmatmul.mubr.f32.gmra.mxu0 %v556
      %v1173 = vpop.f32.mrf.mxu0
      %v1174 = vadd.f32 %v309, %v1173
      %v1175 = vpop.f32.mrf.mxu0
      %1176 = vmatprep.mubr.f32.mxu0 0.0
      %1177 = vmatmul.mubr.f32.gmra.mxu0 %v559
      %v1178 = vpop.f32.mrf.mxu0
      %v1179 = vadd.f32 %v309, %v1178
      %v1180 = vpop.f32.mrf.mxu0
      %1181 = vmatprep.mubr.f32.mxu0 0.0
      %1182 = vmatmul.mubr.f32.gmra.mxu0 %v562
      %v1183 = vpop.f32.mrf.mxu0
      %v1184 = vadd.f32 %v309, %v1183
      %v1185 = vpop.f32.mrf.mxu0
      %1186 = vmatprep.mubr.f32.mxu0 0.0
      %1187 = vmatmul.mubr.f32.gmra.mxu0 %v565
      %v1188 = vpop.f32.mrf.mxu0
      %v1189 = vadd.f32 %v309, %v1188
      %v1190 = vpop.f32.mrf.mxu0
      %1191 = vmatprep.mubr.f32.mxu0 0.0
      %1192 = vmatmul.mubr.f32.gmra.mxu0 %v568
      %v1193 = vpop.f32.mrf.mxu0
      %v1194 = vadd.f32 %v309, %v1193
      %v1195 = vpop.f32.mrf.mxu0
      %1196 = vmatprep.mubr.f32.mxu0 0.0
      %1197 = vmatmul.mubr.f32.gmra.mxu0 %v571
      %v1198 = vpop.f32.mrf.mxu0
      %v1199 = vadd.f32 %v309, %v1198
      %v1200 = vpop.f32.mrf.mxu0
      %1201 = vmatprep.mubr.f32.mxu0 0.0
      %1202 = vmatmul.mubr.f32.gmra.mxu0 %v574
      %v1203 = vpop.f32.mrf.mxu0
      %v1204 = vadd.f32 %v309, %v1203
      %v1205 = vpop.f32.mrf.mxu0
      %1206 = vmatprep.mubr.f32.mxu0 0.0
      %1207 = vmatmul.mubr.f32.gmra.mxu0 %v577
      %v1208 = vpop.f32.mrf.mxu0
      %v1209 = vadd.f32 %v309, %v1208
      %v1210 = vpop.f32.mrf.mxu0
      %1211 = vmatprep.mubr.f32.mxu0 0.0
      %1212 = vmatmul.mubr.f32.gmra.mxu0 %v580
      %v1213 = vpop.f32.mrf.mxu0
      %v1214 = vadd.f32 %v309, %v1213
      %v1215 = vpop.f32.mrf.mxu0
      %1216 = vmatprep.mubr.f32.mxu0 0.0
      %1217 = vmatmul.mubr.f32.gmra.mxu0 %v583
      %v1218 = vpop.f32.mrf.mxu0
      %v1219 = vadd.f32 %v309, %v1218
      %v1220 = vpop.f32.mrf.mxu0
      %1221 = vmatprep.mubr.f32.mxu0 0.0
      %1222 = vmatmul.mubr.f32.gmra.mxu0 %v586
      %v1223 = vpop.f32.mrf.mxu0
      %v1224 = vadd.f32 %v309, %v1223
      %v1225 = vpop.f32.mrf.mxu0
      %1226 = vmatprep.mubr.f32.mxu0 0.0
      %1227 = vmatmul.mubr.f32.gmra.mxu0 %v589
      %v1228 = vpop.f32.mrf.mxu0
      %v1229 = vadd.f32 %v309, %v1228
      %v1230 = vpop.f32.mrf.mxu0
      %1231 = vmatprep.mubr.f32.mxu0 0.0
      %1232 = vmatmul.mubr.f32.gmra.mxu0 %v592
      %v1233 = vpop.f32.mrf.mxu0
      %v1234 = vadd.f32 %v309, %v1233
      %v1235 = vpop.f32.mrf.mxu0
      %1236 = vmatprep.mubr.f32.mxu0 0.0
      %1237 = vmatmul.mubr.f32.gmra.mxu0 %v595
      %v1238 = vpop.f32.mrf.mxu0
      %v1239 = vadd.f32 %v309, %v1238
      %v1240 = vpop.f32.mrf.mxu0
      %1241 = vmatprep.mubr.f32.mxu0 0.0
      %1242 = vmatmul.mubr.f32.gmra.mxu0 %v598
      %v1243 = vpop.f32.mrf.mxu0
      %v1244 = vadd.f32 %v309, %v1243
      %v1245 = vpop.f32.mrf.mxu0
      %1246 = vmatprep.mubr.f32.mxu0 0.0
      %1247 = vmatmul.mubr.f32.gmra.mxu0 %v601
      %v1248 = vpop.f32.mrf.mxu0
      %v1249 = vadd.f32 %v309, %v1248
      %v1250 = vpop.f32.mrf.mxu0
      %1251 = vmatprep.mubr.f32.mxu0 0.0
      %1252 = vmatmul.mubr.f32.gmra.mxu0 %v604
      %v1253 = vpop.f32.mrf.mxu0
      %v1254 = vadd.f32 %v309, %v1253
      %v1255 = vpop.f32.mrf.mxu0
      %1256 = vmatprep.mubr.f32.mxu0 0.0
      %1257 = vmatmul.mubr.f32.gmra.mxu0 %v607
      %v1258 = vpop.f32.mrf.mxu0
      %v1259 = vadd.f32 %v309, %v1258
      %v1260 = vpop.f32.mrf.mxu0
      %1261 = vmatprep.mubr.f32.mxu0 0.0
      %1262 = vmatmul.mubr.f32.gmra.mxu0 %v610
      %v1263 = vpop.f32.mrf.mxu0
      %v1264 = vadd.f32 %v309, %v1263
      %v1265 = vpop.f32.mrf.mxu0
      %1266 = vmatprep.mubr.f32.mxu0 0.0
      %1267 = vmatmul.mubr.f32.gmra.mxu0 %v613
      %v1268 = vpop.f32.mrf.mxu0
      %v1269 = vadd.f32 %v309, %v1268
      %v1270 = vpop.f32.mrf.mxu0
      %1271 = vmatprep.mubr.f32.mxu0 0.0
      %1272 = vmatmul.mubr.f32.gmra.mxu0 %v616
      %v1273 = vpop.f32.mrf.mxu0
      %v1274 = vadd.f32 %v309, %v1273
      %v1275 = vpop.f32.mrf.mxu0
      %1276 = vmatprep.mubr.f32.mxu0 0.0
      %1277 = vmatmul.mubr.f32.gmra.mxu0 %v619
      %v1278 = vpop.f32.mrf.mxu0
      %v1279 = vadd.f32 %v309, %v1278
      %v1280 = vpop.f32.mrf.mxu0
      %1281 = vmatprep.mubr.f32.mxu0 0.0
      %1282 = vmatmul.mubr.f32.gmra.mxu0 %v622
      %v1283 = vpop.f32.mrf.mxu0
      %v1284 = vadd.f32 %v309, %v1283
      %v1285 = vpop.f32.mrf.mxu0
      %1286 = vmatprep.mubr.f32.mxu0 0.0
      %1287 = vmatmul.mubr.f32.gmra.mxu0 %v625
      %v1288 = vpop.f32.mrf.mxu0
      %v1289 = vadd.f32 %v309, %v1288
      %v1290 = vpop.f32.mrf.mxu0
      %1291 = vmatprep.mubr.f32.mxu0 0.0
      %1292 = vmatmul.mubr.f32.gmra.mxu0 %v628
      %v1293 = vpop.f32.mrf.mxu0
      %v1294 = vadd.f32 %v309, %v1293
      %v1295 = vpop.f32.mrf.mxu0
      %1296 = vmatprep.mubr.f32.mxu0 0.0
      %1297 = vmatmul.mubr.f32.gmra.mxu0 %v631
      %v1298 = vpop.f32.mrf.mxu0
      %v1299 = vadd.f32 %v309, %v1298
      %v1300 = vpop.f32.mrf.mxu0
      %1301 = vmatprep.mubr.f32.mxu0 0.0
      %1302 = vmatmul.mubr.f32.gmra.mxu0 %v634
      %v1303 = vpop.f32.mrf.mxu0
      %v1304 = vadd.f32 %v309, %v1303
      %v1305 = vpop.f32.mrf.mxu0
      %1306 = vmatprep.mubr.f32.mxu0 0.0
      %1307 = vmatmul.mubr.f32.gmra.mxu0 %v637
      %v1308 = vpop.f32.mrf.mxu0
      %v1309 = vadd.f32 %v309, %v1308
      %v1310 = vpop.f32.mrf.mxu0
      %1311 = vmatprep.mubr.f32.mxu0 0.0
      %1312 = vmatmul.mubr.f32.gmra.mxu0 %v640
      %v1313 = vpop.f32.mrf.mxu0
      %v1314 = vadd.f32 %v309, %v1313
      %v1315 = vpop.f32.mrf.mxu0
      %1316 = vmatprep.mubr.f32.mxu0 0.0
      %1317 = vmatmul.mubr.f32.gmra.mxu0 %v643
      %v1318 = vpop.f32.mrf.mxu0
      %v1319 = vadd.f32 %v309, %v1318
      %v1320 = vpop.f32.mrf.mxu0
      %1321 = vmatprep.mubr.f32.mxu0 0.0
      %1322 = vmatmul.mubr.f32.gmra.mxu0 %v646
      %v1323 = vpop.f32.mrf.mxu0
      %v1324 = vadd.f32 %v309, %v1323
      %v1325 = vpop.f32.mrf.mxu0
      %1326 = vmatprep.mubr.f32.mxu0 0.0
      %1327 = vmatmul.mubr.f32.gmra.mxu0 %v649
      %v1328 = vpop.f32.mrf.mxu0
      %v1329 = vadd.f32 %v309, %v1328
      %v1330 = vpop.f32.mrf.mxu0
      %1331 = vmatprep.mubr.f32.mxu0 0.0
      %1332 = vmatmul.mubr.f32.gmra.mxu0 %v652
      %v1333 = vpop.f32.mrf.mxu0
      %v1334 = vadd.f32 %v309, %v1333
      %v1335 = vpop.f32.mrf.mxu0
      %1336 = vmatprep.mubr.f32.mxu0 0.0
      %1337 = vmatmul.mubr.f32.gmra.mxu0 %v655
      %v1338 = vpop.f32.mrf.mxu0
      %v1339 = vadd.f32 %v309, %v1338
      %v1340 = vpop.f32.mrf.mxu0
      %1341 = vmatprep.mubr.f32.mxu0 0.0
      %1342 = vmatmul.mubr.f32.gmra.mxu0 %v658
      %v1343 = vpop.f32.mrf.mxu0
      %v1344 = vadd.f32 %v309, %v1343
      %v1345 = vpop.f32.mrf.mxu0
      %1346 = vmatprep.mubr.f32.mxu0 0.0
      %1347 = vmatmul.mubr.f32.gmra.mxu0 %v661
      %v1348 = vpop.f32.mrf.mxu0
      %v1349 = vadd.f32 %v309, %v1348
      %v1350 = vpop.f32.mrf.mxu0
      %1351 = vmatprep.mubr.f32.mxu0 0.0
      %1352 = vmatmul.mubr.f32.gmra.mxu0 %v664
      %v1353 = vpop.f32.mrf.mxu0
      %v1354 = vadd.f32 %v309, %v1353
      %v1355 = vpop.f32.mrf.mxu0
      %1356 = vmatprep.mubr.f32.mxu0 0.0
      %1357 = vmatmul.mubr.f32.gmra.mxu0 %v667
      %v1358 = vpop.f32.mrf.mxu0
      %v1359 = vadd.f32 %v309, %v1358
      %v1360 = vpop.f32.mrf.mxu0
      %1361 = vmatprep.mubr.f32.mxu0 0.0
      %1362 = vmatmul.mubr.f32.gmra.mxu0 %v670
      %v1363 = vpop.f32.mrf.mxu0
      %v1364 = vadd.f32 %v309, %v1363
      %v1365 = vpop.f32.mrf.mxu0
      %1366 = vmatprep.mubr.f32.mxu0 0.0
      %1367 = vmatmul.mubr.f32.gmra.mxu0 %v673
      %v1368 = vpop.f32.mrf.mxu0
      %v1369 = vadd.f32 %v309, %v1368
      %v1370 = vpop.f32.mrf.mxu0
      %1371 = vmatprep.mubr.f32.mxu0 0.0
      %1372 = vmatmul.mubr.f32.gmra.mxu0 %v676
      %v1373 = vpop.f32.mrf.mxu0
      %v1374 = vadd.f32 %v309, %v1373
      %v1375 = vpop.f32.mrf.mxu0
      %1376 = vmatprep.mubr.f32.mxu0 0.0
      %1377 = vmatmul.mubr.f32.gmra.mxu0 %v679
      %v1378 = vpop.f32.mrf.mxu0
      %v1379 = vadd.f32 %v309, %v1378
      %v1380 = vpop.f32.mrf.mxu0
      %1381 = vmatprep.mubr.f32.mxu0 0.0
      %1382 = vmatmul.mubr.f32.gmra.mxu0 %v682
      %v1383 = vpop.f32.mrf.mxu0
      %v1384 = vadd.f32 %v309, %v1383
      %v1385 = vpop.f32.mrf.mxu0
      %1386 = vmatprep.mubr.f32.mxu0 0.0
      %1387 = vmatmul.mubr.f32.gmra.mxu0 %v685
      %v1388 = vpop.f32.mrf.mxu0
      %v1389 = vadd.f32 %v309, %v1388
      %v1390 = vpop.f32.mrf.mxu0
      %1391 = vmatprep.mubr.f32.mxu0 0.0
      %1392 = vmatmul.mubr.f32.gmra.mxu0 %v688
      %v1393 = vpop.f32.mrf.mxu0
      %v1394 = vadd.f32 %v309, %v1393
      %v1395 = vpop.f32.mrf.mxu0
      %1396 = vmatprep.mubr.f32.mxu0 0.0
      %1397 = vmatmul.mubr.f32.gmra.mxu0 %v691
      %v1398 = vpop.f32.mrf.mxu0
      %v1399 = vadd.f32 %v309, %v1398
      %v1400 = vpop.f32.mrf.mxu0
      %1401 = vmatprep.mubr.f32.mxu0 0.0
      %1402 = vmatmul.mubr.f32.gmra.mxu0 %v694
      %v1403 = vpop.f32.mrf.mxu0
      %v1404 = vadd.f32 %v309, %v1403
      %v1405 = vpop.f32.mrf.mxu0
      %1406 = vdwg.mxu0
      %vm1407 = vcmask 130048
      %1408 = vst.msk [vmem:[%s172] sm:$0xff] %vm1407, %v769
      %1409 = vst.msk [vmem:[%s172 + $0x8] sm:$0xff] %vm1407, %v774
      %1410 = vst.msk [vmem:[%s172 + $0x10] sm:$0xff] %vm1407, %v779
      %1411 = vst.msk [vmem:[%s172 + $0x18] sm:$0xff] %vm1407, %v784
      %1412 = vst.msk [vmem:[%s172 + $0x20] sm:$0xff] %vm1407, %v789
      %1413 = vst.msk [vmem:[%s172 + $0x28] sm:$0xff] %vm1407, %v794
      %1414 = vst.msk [vmem:[%s172 + $0x30] sm:$0xff] %vm1407, %v799
      %1415 = vst.msk [vmem:[%s172 + $0x38] sm:$0xff] %vm1407, %v804
      %1416 = vst.msk [vmem:[%s172 + $0x40] sm:$0xff] %vm1407, %v809
      %1417 = vst.msk [vmem:[%s172 + $0x48] sm:$0xff] %vm1407, %v814
      %1418 = vst.msk [vmem:[%s172 + $0x50] sm:$0xff] %vm1407, %v819
      %1419 = vst.msk [vmem:[%s172 + $0x58] sm:$0xff] %vm1407, %v824
      %1420 = vst.msk [vmem:[%s172 + $0x60] sm:$0xff] %vm1407, %v829
      %1421 = vst.msk [vmem:[%s172 + $0x68] sm:$0xff] %vm1407, %v834
      %1422 = vst.msk [vmem:[%s172 + $0x70] sm:$0xff] %vm1407, %v839
      %1423 = vst.msk [vmem:[%s172 + $0x78] sm:$0xff] %vm1407, %v844
      %1424 = vst.msk [vmem:[%s172 + $0x80] sm:$0xff] %vm1407, %v849
      %1425 = vst.msk [vmem:[%s172 + $0x88] sm:$0xff] %vm1407, %v854
      %1426 = vst.msk [vmem:[%s172 + $0x90] sm:$0xff] %vm1407, %v859
      %1427 = vst.msk [vmem:[%s172 + $0x98] sm:$0xff] %vm1407, %v864
      %1428 = vst.msk [vmem:[%s172 + $0xa0] sm:$0xff] %vm1407, %v869
      %1429 = vst.msk [vmem:[%s172 + $0xa8] sm:$0xff] %vm1407, %v874
      %1430 = vst.msk [vmem:[%s172 + $0xb0] sm:$0xff] %vm1407, %v879
      %1431 = vst.msk [vmem:[%s172 + $0xb8] sm:$0xff] %vm1407, %v884
      %1432 = vst.msk [vmem:[%s172 + $0xc0] sm:$0xff] %vm1407, %v889
      %1433 = vst.msk [vmem:[%s172 + $0xc8] sm:$0xff] %vm1407, %v894
      %1434 = vst.msk [vmem:[%s172 + $0xd0] sm:$0xff] %vm1407, %v899
      %1435 = vst.msk [vmem:[%s172 + $0xd8] sm:$0xff] %vm1407, %v904
      %1436 = vst.msk [vmem:[%s172 + $0xe0] sm:$0xff] %vm1407, %v909
      %1437 = vst.msk [vmem:[%s172 + $0xe8] sm:$0xff] %vm1407, %v914
      %1438 = vst.msk [vmem:[%s172 + $0xf0] sm:$0xff] %vm1407, %v919
      %1439 = vst.msk [vmem:[%s172 + $0xf8] sm:$0xff] %vm1407, %v924
      %1440 = vst.msk [vmem:[%s172 + $0x100] sm:$0xff] %vm1407, %v929
      %1441 = vst.msk [vmem:[%s172 + $0x108] sm:$0xff] %vm1407, %v934
      %1442 = vst.msk [vmem:[%s172 + $0x110] sm:$0xff] %vm1407, %v939
      %1443 = vst.msk [vmem:[%s172 + $0x118] sm:$0xff] %vm1407, %v944
      %1444 = vst.msk [vmem:[%s172 + $0x120] sm:$0xff] %vm1407, %v949
      %1445 = vst.msk [vmem:[%s172 + $0x128] sm:$0xff] %vm1407, %v954
      %1446 = vst.msk [vmem:[%s172 + $0x130] sm:$0xff] %vm1407, %v959
      %1447 = vst.msk [vmem:[%s172 + $0x138] sm:$0xff] %vm1407, %v964
      %1448 = vst.msk [vmem:[%s172 + $0x140] sm:$0xff] %vm1407, %v969
      %1449 = vst.msk [vmem:[%s172 + $0x148] sm:$0xff] %vm1407, %v974
      %1450 = vst.msk [vmem:[%s172 + $0x150] sm:$0xff] %vm1407, %v979
      %1451 = vst.msk [vmem:[%s172 + $0x158] sm:$0xff] %vm1407, %v984
      %1452 = vst.msk [vmem:[%s172 + $0x160] sm:$0xff] %vm1407, %v989
      %1453 = vst.msk [vmem:[%s172 + $0x168] sm:$0xff] %vm1407, %v994
      %1454 = vst.msk [vmem:[%s172 + $0x170] sm:$0xff] %vm1407, %v999
      %1455 = vst.msk [vmem:[%s172 + $0x178] sm:$0xff] %vm1407, %v1004
      %1456 = vst.msk [vmem:[%s172 + $0x180] sm:$0xff] %vm1407, %v1009
      %1457 = vst.msk [vmem:[%s172 + $0x188] sm:$0xff] %vm1407, %v1014
      %1458 = vst.msk [vmem:[%s172 + $0x190] sm:$0xff] %vm1407, %v1019
      %1459 = vst.msk [vmem:[%s172 + $0x198] sm:$0xff] %vm1407, %v1024
      %1460 = vst.msk [vmem:[%s172 + $0x1a0] sm:$0xff] %vm1407, %v1029
      %1461 = vst.msk [vmem:[%s172 + $0x1a8] sm:$0xff] %vm1407, %v1034
      %1462 = vst.msk [vmem:[%s172 + $0x1b0] sm:$0xff] %vm1407, %v1039
      %1463 = vst.msk [vmem:[%s172 + $0x1b8] sm:$0xff] %vm1407, %v1044
      %1464 = vst.msk [vmem:[%s172 + $0x1c0] sm:$0xff] %vm1407, %v1049
      %1465 = vst.msk [vmem:[%s172 + $0x1c8] sm:$0xff] %vm1407, %v1054
      %1466 = vst.msk [vmem:[%s172 + $0x1d0] sm:$0xff] %vm1407, %v1059
      %1467 = vst.msk [vmem:[%s172 + $0x1d8] sm:$0xff] %vm1407, %v1064
      %1468 = vst.msk [vmem:[%s172 + $0x1e0] sm:$0xff] %vm1407, %v1069
      %1469 = vst.msk [vmem:[%s172 + $0x1e8] sm:$0xff] %vm1407, %v1074
      %1470 = vst.msk [vmem:[%s172 + $0x1f0] sm:$0xff] %vm1407, %v1079
      %1471 = vst.msk [vmem:[%s172 + $0x1f8] sm:$0xff] %vm1407, %v1084
      %1472 = vst.msk [vmem:[%s172 + $0x200] sm:$0xff] %vm1407, %v1089
      %1473 = vst.msk [vmem:[%s172 + $0x208] sm:$0xff] %vm1407, %v1094
      %1474 = vst.msk [vmem:[%s172 + $0x210] sm:$0xff] %vm1407, %v1099
      %1475 = vst.msk [vmem:[%s172 + $0x218] sm:$0xff] %vm1407, %v1104
      %1476 = vst.msk [vmem:[%s172 + $0x220] sm:$0xff] %vm1407, %v1109
      %1477 = vst.msk [vmem:[%s172 + $0x228] sm:$0xff] %vm1407, %v1114
      %1478 = vst.msk [vmem:[%s172 + $0x230] sm:$0xff] %vm1407, %v1119
      %1479 = vst.msk [vmem:[%s172 + $0x238] sm:$0xff] %vm1407, %v1124
      %1480 = vst.msk [vmem:[%s172 + $0x240] sm:$0xff] %vm1407, %v1129
      %1481 = vst.msk [vmem:[%s172 + $0x248] sm:$0xff] %vm1407, %v1134
      %1482 = vst.msk [vmem:[%s172 + $0x250] sm:$0xff] %vm1407, %v1139
      %1483 = vst.msk [vmem:[%s172 + $0x258] sm:$0xff] %vm1407, %v1144
      %1484 = vst.msk [vmem:[%s172 + $0x260] sm:$0xff] %vm1407, %v1149
      %1485 = vst.msk [vmem:[%s172 + $0x268] sm:$0xff] %vm1407, %v1154
      %1486 = vst.msk [vmem:[%s172 + $0x270] sm:$0xff] %vm1407, %v1159
      %1487 = vst.msk [vmem:[%s172 + $0x278] sm:$0xff] %vm1407, %v1164
      %1488 = vst.msk [vmem:[%s172 + $0x280] sm:$0xff] %vm1407, %v1169
      %1489 = vst.msk [vmem:[%s172 + $0x288] sm:$0xff] %vm1407, %v1174
      %1490 = vst.msk [vmem:[%s172 + $0x290] sm:$0xff] %vm1407, %v1179
      %1491 = vst.msk [vmem:[%s172 + $0x298] sm:$0xff] %vm1407, %v1184
      %1492 = vst.msk [vmem:[%s172 + $0x2a0] sm:$0xff] %vm1407, %v1189
      %1493 = vst.msk [vmem:[%s172 + $0x2a8] sm:$0xff] %vm1407, %v1194
      %1494 = vst.msk [vmem:[%s172 + $0x2b0] sm:$0xff] %vm1407, %v1199
      %1495 = vst.msk [vmem:[%s172 + $0x2b8] sm:$0xff] %vm1407, %v1204
      %1496 = vst.msk [vmem:[%s172 + $0x2c0] sm:$0xff] %vm1407, %v1209
      %1497 = vst.msk [vmem:[%s172 + $0x2c8] sm:$0xff] %vm1407, %v1214
      %1498 = vst.msk [vmem:[%s172 + $0x2d0] sm:$0xff] %vm1407, %v1219
      %1499 = vst.msk [vmem:[%s172 + $0x2d8] sm:$0xff] %vm1407, %v1224
      %1500 = vst.msk [vmem:[%s172 + $0x2e0] sm:$0xff] %vm1407, %v1229
      %1501 = vst.msk [vmem:[%s172 + $0x2e8] sm:$0xff] %vm1407, %v1234
      %1502 = vst.msk [vmem:[%s172 + $0x2f0] sm:$0xff] %vm1407, %v1239
      %1503 = vst.msk [vmem:[%s172 + $0x2f8] sm:$0xff] %vm1407, %v1244
      %1504 = vst.msk [vmem:[%s172 + $0x300] sm:$0xff] %vm1407, %v1249
      %1505 = vst.msk [vmem:[%s172 + $0x308] sm:$0xff] %vm1407, %v1254
      %1506 = vst.msk [vmem:[%s172 + $0x310] sm:$0xff] %vm1407, %v1259
      %1507 = vst.msk [vmem:[%s172 + $0x318] sm:$0xff] %vm1407, %v1264
      %1508 = vst.msk [vmem:[%s172 + $0x320] sm:$0xff] %vm1407, %v1269
      %1509 = vst.msk [vmem:[%s172 + $0x328] sm:$0xff] %vm1407, %v1274
      %1510 = vst.msk [vmem:[%s172 + $0x330] sm:$0xff] %vm1407, %v1279
      %1511 = vst.msk [vmem:[%s172 + $0x338] sm:$0xff] %vm1407, %v1284
      %1512 = vst.msk [vmem:[%s172 + $0x340] sm:$0xff] %vm1407, %v1289
      %1513 = vst.msk [vmem:[%s172 + $0x348] sm:$0xff] %vm1407, %v1294
      %1514 = vst.msk [vmem:[%s172 + $0x350] sm:$0xff] %vm1407, %v1299
      %1515 = vst.msk [vmem:[%s172 + $0x358] sm:$0xff] %vm1407, %v1304
      %1516 = vst.msk [vmem:[%s172 + $0x360] sm:$0xff] %vm1407, %v1309
      %1517 = vst.msk [vmem:[%s172 + $0x368] sm:$0xff] %vm1407, %v1314
      %1518 = vst.msk [vmem:[%s172 + $0x370] sm:$0xff] %vm1407, %v1319
      %1519 = vst.msk [vmem:[%s172 + $0x378] sm:$0xff] %vm1407, %v1324
      %1520 = vst.msk [vmem:[%s172 + $0x380] sm:$0xff] %vm1407, %v1329
      %1521 = vst.msk [vmem:[%s172 + $0x388] sm:$0xff] %vm1407, %v1334
      %1522 = vst.msk [vmem:[%s172 + $0x390] sm:$0xff] %vm1407, %v1339
      %1523 = vst.msk [vmem:[%s172 + $0x398] sm:$0xff] %vm1407, %v1344
      %1524 = vst.msk [vmem:[%s172 + $0x3a0] sm:$0xff] %vm1407, %v1349
      %1525 = vst.msk [vmem:[%s172 + $0x3a8] sm:$0xff] %vm1407, %v1354
      %1526 = vst.msk [vmem:[%s172 + $0x3b0] sm:$0xff] %vm1407, %v1359
      %1527 = vst.msk [vmem:[%s172 + $0x3b8] sm:$0xff] %vm1407, %v1364
      %1528 = vst.msk [vmem:[%s172 + $0x3c0] sm:$0xff] %vm1407, %v1369
      %1529 = vst.msk [vmem:[%s172 + $0x3c8] sm:$0xff] %vm1407, %v1374
      %1530 = vst.msk [vmem:[%s172 + $0x3d0] sm:$0xff] %vm1407, %v1379
      %1531 = vst.msk [vmem:[%s172 + $0x3d8] sm:$0xff] %vm1407, %v1384
      %1532 = vst.msk [vmem:[%s172 + $0x3e0] sm:$0xff] %vm1407, %v1389
      %1533 = vst.msk [vmem:[%s172 + $0x3e8] sm:$0xff] %vm1407, %v1394
      %1534 = vst.msk [vmem:[%s172 + $0x3f0] sm:$0xff] %vm1407, %v1399
      %1535 = vst.msk [vmem:[%s172 + $0x3f8] sm:$0xff] %vm1407, %v1404
      %s1536 = smul.u32 128, %s14
      %p1537 = scmp.lt.s32.totalorder %s1536, 511
      %s1538 = scalar_select %p1537, %s1536, 511
      %s1539 = smul.addr %s1538, 8
      %s1540 = scalar_lea.vmem %s3, %s1539
      // Predicated region
      $region33: #{tpu_custom_call.1} parent=31 // pred_check
        %p1541 = pneg %p100
      $region34: #{tpu_custom_call.1} parent=31 // pred_check_branch
        %1543 = sbr.rel (%p1541) target = $region36
      $region35: #{tpu_custom_call.1} parent=31 // pred_region
        %s1544 = smul.u32 128, %s14
      $region36: #{tpu_custom_call.1} parent=31 // pred_fallthru
        _
    $region32: #{tpu_custom_call.1} parent=5 // pred_fallthru
      _
    %p1545 = scmp.le.s32.totalorder 2, %s9
    // Predicated region
    $region37: #{tpu_custom_call.1} parent=5 // pred_check
      %p1546 = pneg %p1545
    $region38: #{tpu_custom_call.1} parent=5 // pred_check_branch
      %1548 = sbr.rel (%p1546) target = $region40
    $region39: #{tpu_custom_call.1} parent=5 // pred_region
      %s1549 = ssub.s32 %s9, 2
      // Predicated region
      $region41: #{tpu_custom_call.1} parent=39 // pred_check
        %p1550 = pneg %p106
      $region42: #{tpu_custom_call.1} parent=39 // pred_check_branch
        %1552 = sbr.rel (%p1550) target = $region44
      $region43: #{tpu_custom_call.1} parent=39 // pred_region
        %s1553 = smul.u32 128, %s15
        %p1554 = scmp.lt.s32.totalorder %s1553, 511
        %s1555 = scalar_select %p1554, %s1553, 511
        %s1556 = smul.addr %s1555, 8
        %s1557 = scalar_lea.vmem %s3, %s1556
      $region44: #{tpu_custom_call.1} parent=39 // pred_fallthru
        _
    $region40: #{tpu_custom_call.1} parent=5 // pred_fallthru
      _
  $region6: #{tpu_custom_call.1} parent=0 // loop_footer
    %s13 = sadd.s32 1, %s9
  $region7: #{tpu_custom_call.1} parent=0 // loop_footer_branch
    %8 = sbr.rel target = $region3
  $region8: #{tpu_custom_call.1} parent=0 // loop_exit
    _

</llo_original>
